<compile_context>
chip_gen: v6e
topology: v6e:2x2x1
jax: 0.10.0
libtpu: 0.0.40
codegen_flags: <defaults>
</compile_context>

<pallas_src>
import functools

import jax
import jax.numpy as jnp
from jax.experimental import pallas as pl
from jax.experimental.pallas import tpu as pltpu


def _round_up(n, m):
    return ((n + m - 1) // m) * m


def _vmem_cap_bytes():
    """Per-generation usable VMEM budget (leave headroom for compiler scratch)."""
    try:
        cap = int(pltpu.get_tpu_info().vmem_capacity_bytes)
    except Exception:
        cap = 64 << 20  # conservative fallback (v7x-sized)
    if cap <= (64 << 20):                      # v7x: 64 MiB / TC -> keep ~25% headroom
        return (cap * 3) // 4
    return min(cap - (20 << 20), 110 << 20)    # v5e / v6e: up to ~108 MiB of 128 MiB


def _mlp_kernel(x_ref, w1_ref, b1_ref, w2_ref, b2_ref, o_ref, *,
                apply_softmax, out_dim, compute_dtype):
    # Cast the x tile in-kernel (avoids a separate wrapper-side HBM cast pass).
    x = x_ref[...].astype(compute_dtype)
    # fc1: bf16 x bf16 -> f32 accumulation on the MXU.
    h = jnp.dot(x, w1_ref[...], preferred_element_type=jnp.float32)
    h = h + b1_ref[...]
    # dropout(p=0) is the identity (and dropout is a no-op in eval mode).
    # TODO(synk): for dropout_prob > 0 in training mode, draw the mask in-kernel with
    # pltpu.prng_seed / pltpu.stateful_bernoulli.
    h = jnp.tanh(h)
    # TODO(synk): for hidden >~ 2048, chunk the hidden axis with lax.fori_loop
    # (partial fc1 -> tanh -> cast -> accumulate into an f32 [block_m, out] scratch)
    # to bound the f32 intermediate / vreg pressure.
    # fc2: bf16 x bf16 -> f32 accumulation.
    out = jnp.dot(h.astype(compute_dtype), w2_ref[...],
                  preferred_element_type=jnp.float32)
    out = out + b2_ref[...]
    if apply_softmax:
        out_pad = o_ref.shape[-1]
        if out_pad != out_dim:
            # Lane-padded logits contribute nothing: exp(-inf) == 0.
            col = jax.lax.broadcasted_iota(jnp.int32, out.shape, dimension=1)
            out = jnp.where(col < out_dim, out, -jnp.inf)
        m = jnp.max(out, axis=-1, keepdims=True)
        e = jnp.exp(out - m)
        # Exact normalization (approx reciprocal previously broke sum(p) == 1 checks).
        out = e / jnp.sum(e, axis=-1, keepdims=True)
    o_ref[...] = out.astype(o_ref.dtype)


def mlp_forward(x, w1, b1, w2, b2, *, for_labels=False, block_m=None,
                compute_dtype=jnp.bfloat16, out_dtype=jnp.float32):
    """Pallas MLP forward.

    x:  [B, input_size]        (any float dtype; cast to compute_dtype inside the kernel)
    w1: [input_size, hidden]   b1: [hidden]
    w2: [hidden, out_dim]      b2: [out_dim]
    returns [B, out_dim]  (softmaxed over last axis if for_labels=True)
    """
    B, in_dim = x.shape
    hidden = w1.shape[1]
    out_dim = w2.shape[1]
    cdt = jnp.dtype(compute_dtype)
    odt = jnp.dtype(out_dtype)
    xb = jnp.dtype(x.dtype).itemsize
    cb = cdt.itemsize

    # --- tile sizing ---------------------------------------------------------------
    if block_m is None:
        if B <= 256:
            block_m = B  # one grid step; avoid an extra batch-padding pass when possible
        else:
            # Aim for >= 2 grid steps so both v7x TensorCores get work; 256-row multiples
            # feed the 256-wide MXU; cap at 512 rows per step.
            block_m = min(512, _round_up(pl.cdiv(B, 2), 256))
    block_m = max(8, block_m)
    block_m = _round_up(block_m, 16 if block_m >= 16 else 8)   # bf16 sublane packing
    B_pad = _round_up(B, block_m)
    grid_m = B_pad // block_m

    # Lane-dense output slab only for wide heads; tiny heads (e.g. regressor out_dim=1)
    # keep their true width to avoid massive HBM write amplification.
    out_pad = out_dim if out_dim <= 128 else _round_up(out_dim, 128)

    # --- operand prep (no redundant HBM passes) --------------------------------------
    x_p = x if B_pad == B else jnp.pad(x, ((0, B_pad - B), (0, 0)))
    w1_c = w1 if w1.dtype == cdt else w1.astype(cdt)   # no-op if weights pre-cast at init
    w2_c = w2 if w2.dtype == cdt else w2.astype(cdt)
    b2_p = b2.astype(jnp.float32)
    if out_pad != out_dim:
        w2_c = jnp.pad(w2_c, ((0, 0), (0, out_pad - out_dim)))
        b2_p = jnp.pad(b2_p, (0, out_pad - out_dim))
    b1_2d = b1.astype(jnp.float32).reshape(1, hidden)
    b2_2d = b2_p.reshape(1, out_pad)

    # --- cost estimate for the XLA scheduler -----------------------------------------
    flops = 2 * B_pad * (in_dim * hidden + hidden * out_pad)
    transcendentals = B_pad * hidden + (B_pad * out_pad if for_labels else 0)
    bytes_accessed = (B_pad * in_dim * xb + in_dim * hidden * cb
                      + hidden * out_pad * cb + (hidden + out_pad) * 4
                      + B_pad * out_pad * odt.itemsize)
    cost = pl.CostEstimate(flops=flops, transcendentals=transcendentals,
                           bytes_accessed=bytes_accessed)

    kernel = functools.partial(_mlp_kernel, apply_softmax=for_labels,
                               out_dim=out_dim, compute_dtype=cdt)
    vmem_cap = _vmem_cap_bytes()

    def run(single_buffer_weights):
        # Weight/bias index_maps are constant -> single-buffer them to halve their VMEM.
        wkw = dict(pipeline_mode=pl.Buffered(1)) if single_buffer_weights else {}
        in_specs = [
            pl.BlockSpec((block_m, in_dim), lambda i: (i, 0)),          # x tile (pipelined)
            pl.BlockSpec((in_dim, hidden), lambda i: (0, 0), **wkw),    # W1 (resident)
            pl.BlockSpec((1, hidden), lambda i: (0, 0), **wkw),         # b1
            pl.BlockSpec((hidden, out_pad), lambda i: (0, 0), **wkw),   # W2 (resident)
            pl.BlockSpec((1, out_pad), lambda i: (0, 0), **wkw),        # b2
        ]
        out_specs = pl.BlockSpec((block_m, out_pad), lambda i: (i, 0))

        # VMEM budget: resident weights (x1 single-buffered / x2 default), double-buffered
        # x/out tiles, plus the f32 h intermediate and its bf16 copy, plus headroom.
        wmul = 1 if single_buffer_weights else 2
        weight_bytes = ((in_dim * hidden + hidden * out_pad) * cb
                        + (hidden + out_pad) * 4) * wmul
        io_bytes = 2 * block_m * (in_dim * xb + out_pad * odt.itemsize)
        h_bytes = block_m * hidden * (4 + cb)
        needed = weight_bytes + io_bytes + h_bytes + (2 << 20)
        vmem_limit = int(min(vmem_cap, max(needed, 16 << 20)))
        # TODO(synk): when weight_bytes exceeds ~75% of vmem_cap (notably on v7x's 64 MiB),
        # add an 'arbitrary' grid axis over `hidden` that streams W1/W2 panels into an f32
        # [block_m, out_pad] accumulator (pl.when init/finalize) instead of full residency.

        return pl.pallas_call(
            kernel,
            out_shape=jax.ShapeDtypeStruct((B_pad, out_pad), odt),
            grid_spec=pltpu.PrefetchScalarGridSpec(
                num_scalar_prefetch=0,
                grid=(grid_m,),
                in_specs=in_specs,
                out_specs=out_specs,
            ),
            compiler_params=pltpu.CompilerParams(
                dimension_semantics=("parallel",),
                vmem_limit_bytes=vmem_limit),
            cost_estimate=cost,
        )(x_p, w1_c, b1_2d, w2_c, b2_2d)

    try:
        out_padded = run(True)
    except Exception:
        # Installed jax rejected pl.Buffered(1) on a constant block -> default buffering.
        out_padded = run(False)

    return out_padded[:B, :out_dim]


def init_mlp_params(key, input_size, hidden_size, out_dim):
    """Deterministic uniform(-1/sqrt(fan_in), 1/sqrt(fan_in)) init, like nn.Linear."""
    k1, k2, k3, k4 = jax.random.split(key, 4)
    lim1 = 1.0 / (input_size ** 0.5)
    lim2 = 1.0 / (hidden_size ** 0.5)
    w1 = jax.random.uniform(k1, (input_size, hidden_size), jnp.float32, -lim1, lim1)
    b1 = jax.random.uniform(k2, (hidden_size,), jnp.float32, -lim1, lim1)
    w2 = jax.random.uniform(k3, (hidden_size, out_dim), jnp.float32, -lim2, lim2)
    b2 = jax.random.uniform(k4, (out_dim,), jnp.float32, -lim2, lim2)
    return w1, b1, w2, b2


def prepare_params(w1, b1, w2, b2, compute_dtype=jnp.bfloat16):
    """Cast the matmul weights to the MXU compute dtype ONCE (not per forward call)."""
    return w1.astype(compute_dtype), b1, w2.astype(compute_dtype), b2


def _reference(x, w1, b1, w2, b2, for_labels, compute_dtype=jnp.bfloat16):
    """Reference with the same bf16-inputs / f32-accumulation recipe as the kernel."""
    cdt = jnp.dtype(compute_dtype)
    h = jnp.dot(x.astype(cdt), w1.astype(cdt), preferred_element_type=jnp.float32) + b1
    h = jnp.tanh(h)
    out = jnp.dot(h.astype(cdt), w2.astype(cdt), preferred_element_type=jnp.float32) + b2
    if for_labels:
        out = jax.nn.softmax(out, axis=-1)
    return out


if __name__ == "__main__":
    key = jax.random.PRNGKey(0)
    batch, input_size, hidden_size, n_labels = 8, 32, 32, 4

    kx, kp1, kp2, kp3 = jax.random.split(key, 4)
    x = jax.random.normal(kx, (batch, input_size), jnp.float32)

    # Path 1: regressor head (for_labels=False, fc2 -> 1; tiny head, no lane padding)
    w1, b1, w2, b2 = init_mlp_params(kp1, input_size, hidden_size, 1)
    params_reg = prepare_params(w1, b1, w2, b2)           # bf16 weights, cast once
    out_reg = jax.block_until_ready(mlp_forward(x, *params_reg, for_labels=False))
    ref_reg = _reference(x, w1, b1, w2, b2, False)
    assert out_reg.shape == (batch, 1)
    assert jnp.allclose(out_reg, ref_reg, atol=1e-2, rtol=1e-2), \
        f"regressor mismatch, max abs diff {jnp.max(jnp.abs(out_reg - ref_reg))}"

    # Path 2: label head (for_labels=True, fc2 -> n_labels, exact softmax)
    w1l, b1l, w2l, b2l = init_mlp_params(kp2, input_size, hidden_size, n_labels)
    params_lbl = prepare_params(w1l, b1l, w2l, b2l)
    out_lbl = jax.block_until_ready(mlp_forward(x, *params_lbl, for_labels=True))
    ref_lbl = _reference(x, w1l, b1l, w2l, b2l, True)
    assert out_lbl.shape == (batch, n_labels)
    assert jnp.allclose(out_lbl, ref_lbl, atol=1e-2, rtol=1e-2), \
        f"label mismatch, max abs diff {jnp.max(jnp.abs(out_lbl - ref_lbl))}"
    assert jnp.allclose(jnp.sum(out_lbl, axis=-1), 1.0, atol=1e-3)

    # Path 3: ragged batch (wrapper-side row padding, no in-kernel assert on B % block_m)
    x5 = x[:5]
    out_r = jax.block_until_ready(mlp_forward(x5, *params_lbl, for_labels=True))
    ref_r = _reference(x5, w1l, b1l, w2l, b2l, True)
    assert out_r.shape == (5, n_labels)
    assert jnp.allclose(out_r, ref_r, atol=1e-2, rtol=1e-2)

    # Path 4: wide label head (> 128 labels) exercises the lane-padded + masked softmax path
    wide_labels = 150
    w1w, b1w, w2w, b2w = init_mlp_params(kp3, input_size, hidden_size, wide_labels)
    params_wide = prepare_params(w1w, b1w, w2w, b2w)
    out_w = jax.block_until_ready(mlp_forward(x, *params_wide, for_labels=True))
    ref_w = _reference(x, w1w, b1w, w2w, b2w, True)
    assert out_w.shape == (batch, wide_labels)
    assert jnp.allclose(out_w, ref_w, atol=1e-2, rtol=1e-2)
    assert jnp.allclose(jnp.sum(out_w, axis=-1), 1.0, atol=1e-3)

    print("KERNEL_OK")
</pallas_src>

<mosaic_0001>
module attributes {stable_mosaic.version = 11 : i64} {
  func.func @_mlp_kernel(%arg0: i32, %arg1: memref<8x32xf32, #tpu.memory_space<vmem>>, %arg2: memref<32x32xbf16, #tpu.memory_space<vmem>>, %arg3: memref<1x32xf32, #tpu.memory_space<vmem>>, %arg4: memref<32x1xbf16, #tpu.memory_space<vmem>>, %arg5: memref<1x1xf32, #tpu.memory_space<vmem>>, %arg6: memref<8x1xf32, #tpu.memory_space<vmem>>) attributes {dimension_semantics = [#tpu.dimension_semantics<parallel>], iteration_bounds = array<i64: 1>, scalar_prefetch = 0 : i64, scratch_operands = 0 : i64, tpu.core_type = #tpu.core_type<tc>, window_params = [{transform_indices = @transform_0, window_bounds = array<i64: 8, 32>}, {pipeline_mode = #tpu.pipeline_mode<synchronous>, transform_indices = @transform_1, window_bounds = array<i64: 32, 32>}, {pipeline_mode = #tpu.pipeline_mode<synchronous>, transform_indices = @transform_2, window_bounds = array<i64: 1, 32>}, {pipeline_mode = #tpu.pipeline_mode<synchronous>, transform_indices = @transform_3, window_bounds = array<i64: 32, 1>}, {pipeline_mode = #tpu.pipeline_mode<synchronous>, transform_indices = @transform_4, window_bounds = array<i64: 1, 1>}, {transform_indices = @transform_5, window_bounds = array<i64: 8, 1>}]} {
    %c0 = arith.constant 0 : index
    %c0_0 = arith.constant 0 : index
    %0 = vector.load %arg1[%c0, %c0_0] : memref<8x32xf32, #tpu.memory_space<vmem>>, vector<8x32xf32>
    %1 = arith.truncf %0 : vector<8x32xf32> to vector<8x32xbf16>
    %c0_1 = arith.constant 0 : index
    %c0_2 = arith.constant 0 : index
    %2 = vector.load %arg2[%c0_1, %c0_2] : memref<32x32xbf16, #tpu.memory_space<vmem>>, vector<32x32xbf16>
    %cst = arith.constant dense<0.000000e+00> : vector<8x32xf32>
    %3 = tpu.matmul %1, %2, %cst {dimension_numbers = #tpu.dot_dimension_numbers<[1], [0], [0], [1], [0, 0, 1, 1], [], []>} : vector<8x32xbf16>, vector<32x32xbf16>, vector<8x32xf32> -> vector<8x32xf32>
    %c0_3 = arith.constant 0 : index
    %c0_4 = arith.constant 0 : index
    %4 = vector.load %arg3[%c0_3, %c0_4] : memref<1x32xf32, #tpu.memory_space<vmem>>, vector<1x32xf32>
    %5 = vector.broadcast %4 : vector<1x32xf32> to vector<8x32xf32>
    %6 = arith.addf %3, %5 : vector<8x32xf32>
    %7 = math.tanh %6 : vector<8x32xf32>
    %8 = arith.truncf %7 : vector<8x32xf32> to vector<8x32xbf16>
    %c0_5 = arith.constant 0 : index
    %c0_6 = arith.constant 0 : index
    %9 = vector.load %arg4[%c0_5, %c0_6] : memref<32x1xbf16, #tpu.memory_space<vmem>>, vector<32x1xbf16>
    %cst_7 = arith.constant dense<0.000000e+00> : vector<8x1xf32>
    %10 = tpu.matmul %8, %9, %cst_7 {dimension_numbers = #tpu.dot_dimension_numbers<[1], [0], [0], [1], [0, 0, 1, 1], [], []>} : vector<8x32xbf16>, vector<32x1xbf16>, vector<8x1xf32> -> vector<8x1xf32>
    %c0_8 = arith.constant 0 : index
    %c0_9 = arith.constant 0 : index
    %11 = vector.load %arg5[%c0_8, %c0_9] : memref<1x1xf32, #tpu.memory_space<vmem>>, vector<1x1xf32>
    %12 = vector.broadcast %11 : vector<1x1xf32> to vector<8x1xf32>
    %13 = arith.addf %10, %12 : vector<8x1xf32>
    %c0_10 = arith.constant 0 : index
    %c0_11 = arith.constant 0 : index
    %14 = vector.load %arg6[%c0_10, %c0_11] : memref<8x1xf32, #tpu.memory_space<vmem>>, vector<8x1xf32>
    tpu.vector_store %arg6[%c0_10, %c0_11], %13 {strides = array<i32>} : memref<8x1xf32, #tpu.memory_space<vmem>>, vector<8x1xf32>,
    return
  }
  func.func @transform_0(%arg0: i32) -> (i32, i32) {
    %c0_i32 = arith.constant 0 : i32
    %c0_i32_0 = arith.constant 0 : i32
    return %arg0, %c0_i32 : i32, i32
  }
  func.func @transform_1(%arg0: i32) -> (i32, i32) {
    %c0_i32 = arith.constant 0 : i32
    %c0_i32_0 = arith.constant 0 : i32
    %c0_i32_1 = arith.constant 0 : i32
    return %c0_i32, %c0_i32_0 : i32, i32
  }
  func.func @transform_2(%arg0: i32) -> (i32, i32) {
    %c0_i32 = arith.constant 0 : i32
    %c0_i32_0 = arith.constant 0 : i32
    %c0_i32_1 = arith.constant 0 : i32
    return %c0_i32, %c0_i32_0 : i32, i32
  }
  func.func @transform_3(%arg0: i32) -> (i32, i32) {
    %c0_i32 = arith.constant 0 : i32
    %c0_i32_0 = arith.constant 0 : i32
    %c0_i32_1 = arith.constant 0 : i32
    return %c0_i32, %c0_i32_0 : i32, i32
  }
  func.func @transform_4(%arg0: i32) -> (i32, i32) {
    %c0_i32 = arith.constant 0 : i32
    %c0_i32_0 = arith.constant 0 : i32
    %c0_i32_1 = arith.constant 0 : i32
    return %c0_i32, %c0_i32_0 : i32, i32
  }
  func.func @transform_5(%arg0: i32) -> (i32, i32) {
    %c0_i32 = arith.constant 0 : i32
    %c0_i32_0 = arith.constant 0 : i32
    return %arg0, %c0_i32 : i32, i32
  }
}

module attributes {stable_mosaic.version = 11 : i64} {
  func.func @_mlp_kernel(%arg0: i32, %arg1: memref<8x32xf32, #tpu.memory_space<vmem>>, %arg2: memref<32x32xbf16, #tpu.memory_space<vmem>>, %arg3: memref<1x32xf32, #tpu.memory_space<vmem>>, %arg4: memref<32x1xbf16, #tpu.memory_space<vmem>>, %arg5: memref<1x1xf32, #tpu.memory_space<vmem>>, %arg6: memref<8x1xf32, #tpu.memory_space<vmem>>) attributes {dimension_semantics = [#tpu.dimension_semantics<parallel>], iteration_bounds = array<i64: 1>, scalar_prefetch = 0 : i64, scratch_operands = 0 : i64, tpu.core_type = #tpu.core_type<tc>, window_params = [{transform_indices = @transform_0, window_bounds = array<i64: 8, 32>}, {pipeline_mode = #tpu.pipeline_mode<synchronous>, transform_indices = @transform_1, window_bounds = array<i64: 32, 32>}, {pipeline_mode = #tpu.pipeline_mode<synchronous>, transform_indices = @transform_2, window_bounds = array<i64: 1, 32>}, {pipeline_mode = #tpu.pipeline_mode<synchronous>, transform_indices = @transform_3, window_bounds = array<i64: 32, 1>}, {pipeline_mode = #tpu.pipeline_mode<synchronous>, transform_indices = @transform_4, window_bounds = array<i64: 1, 1>}, {transform_indices = @transform_5, window_bounds = array<i64: 8, 1>}]} {
    %c0 = arith.constant 0 : index
    %c0_0 = arith.constant 0 : index
    %0 = vector.load %arg1[%c0, %c0_0] : memref<8x32xf32, #tpu.memory_space<vmem>>, vector<8x32xf32>
    %1 = arith.truncf %0 : vector<8x32xf32> to vector<8x32xbf16>
    %c0_1 = arith.constant 0 : index
    %c0_2 = arith.constant 0 : index
    %2 = vector.load %arg2[%c0_1, %c0_2] : memref<32x32xbf16, #tpu.memory_space<vmem>>, vector<32x32xbf16>
    %cst = arith.constant dense<0.000000e+00> : vector<8x32xf32>
    %3 = tpu.matmul %1, %2, %cst {dimension_numbers = #tpu.dot_dimension_numbers<[1], [0], [0], [1], [0, 0, 1, 1], [], []>} : vector<8x32xbf16>, vector<32x32xbf16>, vector<8x32xf32> -> vector<8x32xf32>
    %c0_3 = arith.constant 0 : index
    %c0_4 = arith.constant 0 : index
    %4 = vector.load %arg3[%c0_3, %c0_4] : memref<1x32xf32, #tpu.memory_space<vmem>>, vector<1x32xf32>
    %5 = vector.broadcast %4 : vector<1x32xf32> to vector<8x32xf32>
    %6 = arith.addf %3, %5 : vector<8x32xf32>
    %7 = math.tanh %6 : vector<8x32xf32>
    %8 = arith.truncf %7 : vector<8x32xf32> to vector<8x32xbf16>
    %c0_5 = arith.constant 0 : index
    %c0_6 = arith.constant 0 : index
    %9 = vector.load %arg4[%c0_5, %c0_6] : memref<32x1xbf16, #tpu.memory_space<vmem>>, vector<32x1xbf16>
    %cst_7 = arith.constant dense<0.000000e+00> : vector<8x1xf32>
    %10 = tpu.matmul %8, %9, %cst_7 {dimension_numbers = #tpu.dot_dimension_numbers<[1], [0], [0], [1], [0, 0, 1, 1], [], []>} : vector<8x32xbf16>, vector<32x1xbf16>, vector<8x1xf32> -> vector<8x1xf32>
    %c0_8 = arith.constant 0 : index
    %c0_9 = arith.constant 0 : index
    %11 = vector.load %arg5[%c0_8, %c0_9] : memref<1x1xf32, #tpu.memory_space<vmem>>, vector<1x1xf32>
    %12 = vector.broadcast %11 : vector<1x1xf32> to vector<8x1xf32>
    %13 = arith.addf %10, %12 : vector<8x1xf32>
    %c0_10 = arith.constant 0 : index
    %c0_11 = arith.constant 0 : index
    %14 = vector.load %arg6[%c0_10, %c0_11] : memref<8x1xf32, #tpu.memory_space<vmem>>, vector<8x1xf32>
    tpu.vector_store %arg6[%c0_10, %c0_11], %13 {strides = array<i32>} : memref<8x1xf32, #tpu.memory_space<vmem>>, vector<8x1xf32>,
    return
  }
  func.func @transform_0(%arg0: i32) -> (i32, i32) {
    %c0_i32 = arith.constant 0 : i32
    %c0_i32_0 = arith.constant 0 : i32
    return %arg0, %c0_i32 : i32, i32
  }
  func.func @transform_1(%arg0: i32) -> (i32, i32) {
    %c0_i32 = arith.constant 0 : i32
    %c0_i32_0 = arith.constant 0 : i32
    %c0_i32_1 = arith.constant 0 : i32
    return %c0_i32, %c0_i32_0 : i32, i32
  }
  func.func @transform_2(%arg0: i32) -> (i32, i32) {
    %c0_i32 = arith.constant 0 : i32
    %c0_i32_0 = arith.constant 0 : i32
    %c0_i32_1 = arith.constant 0 : i32
    return %c0_i32, %c0_i32_0 : i32, i32
  }
  func.func @transform_3(%arg0: i32) -> (i32, i32) {
    %c0_i32 = arith.constant 0 : i32
    %c0_i32_0 = arith.constant 0 : i32
    %c0_i32_1 = arith.constant 0 : i32
    return %c0_i32, %c0_i32_0 : i32, i32
  }
  func.func @transform_4(%arg0: i32) -> (i32, i32) {
    %c0_i32 = arith.constant 0 : i32
    %c0_i32_0 = arith.constant 0 : i32
    %c0_i32_1 = arith.constant 0 : i32
    return %c0_i32, %c0_i32_0 : i32, i32
  }
  func.func @transform_5(%arg0: i32) -> (i32, i32) {
    %c0_i32 = arith.constant 0 : i32
    %c0_i32_0 = arith.constant 0 : i32
    return %arg0, %c0_i32 : i32, i32
  }
}

</mosaic_0001>

<llo_original>
// kernel: tpu_custom_call.1
$region0: #{tpu_custom_call.1}
  #allocation0 [shape = 'u32[]', space=smem, size = 0x4, offset = 0x4, fixed_abs, tag = 'smem constant byte address 0x4 - core index']
  #allocation1 [shape = 'u32[144,128]{1,0:T(1,128)}', space=vmem, size = 0x12000, scoped, tag = 'internal scratch']
  #allocation2 [shape = 'f32[1,1]{1,0:T(1,128)S(1)}', space=vmem, size = 0x200, scoped, tag = 'scoped memory for tpu_custom_call.1']
  %s0 = inlined_call_operand.hbm [shape: f32[8,32], index: 0, kind: input, shape index: {}]
  %s1 = inlined_call_operand.vmem [shape: bf16[32,32], index: 1, kind: input, shape index: {}]
  %s2 = inlined_call_operand.vmem [shape: f32[1,32], index: 2, kind: input, shape index: {}]
  %s3 = inlined_call_operand.vmem [shape: bf16[32,1], index: 3, kind: input, shape index: {}]
  %s4 = inlined_call_operand.<no memory space> [shape: f32[1,1], index: 4, kind: input, shape index: {}]
  %s5 = inlined_call_operand.vmem [shape: f32[8,1], index: 5, kind: output, shape index: {}]
  %s6 = sld [smem:[#allocation0]]
  $region34: #{tpu_custom_call.1} parent=0
    _
  %s8 = ssub.s32 1, %s6
  %s9 = scalar_select 0, %s8, %s6
  %v10 = vstv %s4
  %11 = vst [vmem:[#allocation2] sm:$0x1] %v10
  $region1: #{tpu_custom_call.1} parent=0
    #allocation3 [shape = 'u8[4096]{0}', space=vmem, size = 0x1000, scoped, tag = 'input window, operand 0, single buffered']
    #allocation4 [shape = 's32[1]{0}', space=sflag, size = 0x4, scoped, tag = 'scoped memory for tpu_custom_call.1']
    %12 = vsyncpa [#allocation4], 0
    // Predicated region
    $region2: #{tpu_custom_call.1} parent=1 // pred_check
      _
    $region3: #{tpu_custom_call.1} parent=1 // pred_check_branch
      %14 = sbr.rel (0) target = $region5
    $region4: #{tpu_custom_call.1} parent=1 // pred_region
      %s16 = ssub.s32 128, 128
      %17 = vsyncadd [#allocation4], %s16
      %s19 = sshll.u32 [#allocation3], 4
      %s20 = int_to_ptr.vmem [resolvable:$true] %s19
      %22 = dma.hbm_to_vmem [thread:$0]  %s0, 128, %s20, [#allocation4]
    $region5: #{tpu_custom_call.1} parent=1 // pred_fallthru
      _
    // Predicated region
    $region6: #{tpu_custom_call.1} parent=1 // pred_check
      _
    $region7: #{tpu_custom_call.1} parent=1 // pred_check_branch
      %24 = sbr.rel (0) target = $region9
    $region8: #{tpu_custom_call.1} parent=1 // pred_region
      _
    $region9: #{tpu_custom_call.1} parent=1 // pred_fallthru
      _
    // Predicated region
    $region10: #{tpu_custom_call.1} parent=1 // pred_check
      _
    $region11: #{tpu_custom_call.1} parent=1 // pred_check_branch
      %26 = sbr.rel (0) target = $region13
    $region12: #{tpu_custom_call.1} parent=1 // pred_region
      _
    $region13: #{tpu_custom_call.1} parent=1 // pred_fallthru
      _
    // Predicated region
    $region14: #{tpu_custom_call.1} parent=1 // pred_check
      _
    $region15: #{tpu_custom_call.1} parent=1 // pred_check_branch
      %28 = sbr.rel (0) target = $region17
    $region16: #{tpu_custom_call.1} parent=1 // pred_region
      _
    $region17: #{tpu_custom_call.1} parent=1 // pred_fallthru
      _
    // Predicated region
    $region18: #{tpu_custom_call.1} parent=1 // pred_check
      _
    $region19: #{tpu_custom_call.1} parent=1 // pred_check_branch
      %30 = sbr.rel (0) target = $region21
    $region20: #{tpu_custom_call.1} parent=1 // pred_region
      _
    $region21: #{tpu_custom_call.1} parent=1 // pred_fallthru
      _
    // Predicated region
    $region22: #{tpu_custom_call.1} parent=1 // pred_check
      _
    $region23: #{tpu_custom_call.1} parent=1 // pred_check_branch
      %32 = sbr.rel (0) target = $region25
    $region24: #{tpu_custom_call.1} parent=1 // pred_region
      %33 = dma.done [#allocation4], 128
    $region25: #{tpu_custom_call.1} parent=1 // pred_fallthru
      _
    %v35 = vld [vmem:[#allocation3] sm:$0xff]
    %v36 = vpack.c.bf16 %v35, %v35
    %v37 = vld [vmem:[%s1] sm:$0xf]
    %v38 = vld [vmem:[%s1 + $0x4] sm:$0xf]
    %v39 = vld [vmem:[%s1 + $0x8] sm:$0xf]
    %v40 = vld [vmem:[%s1 + $0xc] sm:$0xf]
    %v41 = vld [vmem:[%s2] sm:$0x1]
    %v43 = vlaneseq
    %v44 = vshrl.u32 %v43, 7
    %v45 = vsub.s32 0, %v44
    %v46 = vrot.slane %v41, %v45
    %v52 = vunpack.c.l.b16 %v37
    %v53 = vunpack.c.l.b16 %v38
    %v54 = vunpack.c.l.b16 %v39
    %v55 = vunpack.c.l.b16 %v40
    %v56 = vpack.c.b16 %v53, %v52
    %v57 = vpack.c.b16 %v55, %v54
    %vm60 = vcmask 261120
    %v62 = vsel %vm60, %v36, 0
    %64 = vmatprep.subr.bf16.mxu0 0
    %65 = vmatpush1.bf16.msra.mxu0 0
    %66 = vmatprep.subr.bf16.mxu0 0
    %67 = vmatpush1.bf16.msra.mxu0 0
    %68 = vmatprep.subr.bf16.mxu0 0
    %69 = vmatpush1.bf16.msra.mxu0 0
    %70 = vmatprep.subr.bf16.mxu0 0
    %71 = vmatpush1.bf16.msra.mxu0 0
    %72 = vmatprep.subr.bf16.mxu0 0
    %73 = vmatpush1.bf16.msra.mxu0 0
    %74 = vmatprep.subr.bf16.mxu0 0
    %75 = vmatpush1.bf16.msra.mxu0 0
    %76 = vmatprep.subr.bf16.mxu0 0
    %77 = vmatpush1.bf16.msra.mxu0 %v57
    %78 = vmatprep.subr.bf16.mxu0 0
    %79 = vmatpush1.bf16.msra.mxu0 %v56
    %80 = vmatprep.subr.bf16.mxu0 0
    %81 = vmatpush2.bf16.msra.mxu0 0
    %82 = vmatprep.subr.bf16.mxu0 0
    %83 = vmatpush2.bf16.msra.mxu0 0
    %84 = vmatprep.subr.bf16.mxu0 0
    %85 = vmatpush2.bf16.msra.mxu0 0
    %86 = vmatprep.subr.bf16.mxu0 0
    %87 = vmatpush2.bf16.msra.mxu0 0
    %88 = vmatprep.subr.bf16.mxu0 0
    %89 = vmatpush2.bf16.msra.mxu0 0
    %90 = vmatprep.subr.bf16.mxu0 0
    %91 = vmatpush2.bf16.msra.mxu0 0
    %92 = vmatprep.subr.bf16.mxu0 0
    %93 = vmatpush2.bf16.msra.mxu0 0
    %94 = vmatprep.subr.bf16.mxu0 0
    %95 = vmatpush2.bf16.msra.mxu0 0
    %96 = vmatprep.mubr.bf16.mxu0 0
    %97 = vmatmul.mubr.bf16.gmra.mxu0 %v62
    %v98 = vpop.f32.mrf.mxu0
    %v99 = vadd.f32 %v46, %v98
    %v100 = vpop.f32.mrf.mxu0
    %v101 = vpop.f32.mrf.mxu0
    %v102 = vpop.f32.mrf.mxu0
    %103 = vdwg.mxu0
    %v104 = vtanh.pop %v99
    %v105 = vpack.c.bf16 %v104, %v104
    %v106 = vld [vmem:[%s3] sm:$0xf]
    %v107 = vld [vmem:[%s3 + $0x4] sm:$0xf]
    %v108 = vld [vmem:[%s3 + $0x8] sm:$0xf]
    %v109 = vld [vmem:[%s3 + $0xc] sm:$0xf]
    %v110 = vld [vmem:[#allocation2] sm:$0x1]
    %v112 = vlaneseq
    %v113 = vshrl.u32 %v112, 7
    %v114 = vsub.s32 0, %v113
    %v115 = vrot.slane %v110, %v114
    %v121 = vunpack.c.l.b16 %v106
    %v122 = vunpack.c.l.b16 %v107
    %v123 = vunpack.c.l.b16 %v108
    %v124 = vunpack.c.l.b16 %v109
    %v125 = vpack.c.b16 %v122, %v121
    %v126 = vpack.c.b16 %v124, %v123
    %v130 = vsel %vm60, %v105, 0
    %132 = vmatprep.subr.bf16.mxu0 0
    %133 = vmatpush1.bf16.msra.mxu0 0
    %134 = vmatprep.subr.bf16.mxu0 0
    %135 = vmatpush1.bf16.msra.mxu0 0
    %136 = vmatprep.subr.bf16.mxu0 0
    %137 = vmatpush1.bf16.msra.mxu0 0
    %138 = vmatprep.subr.bf16.mxu0 0
    %139 = vmatpush1.bf16.msra.mxu0 0
    %140 = vmatprep.subr.bf16.mxu0 0
    %141 = vmatpush1.bf16.msra.mxu0 0
    %142 = vmatprep.subr.bf16.mxu0 0
    %143 = vmatpush1.bf16.msra.mxu0 0
    %144 = vmatprep.subr.bf16.mxu0 0
    %145 = vmatpush1.bf16.msra.mxu0 %v126
    %146 = vmatprep.subr.bf16.mxu0 0
    %147 = vmatpush1.bf16.msra.mxu0 %v125
    %148 = vmatprep.subr.bf16.mxu0 0
    %149 = vmatpush2.bf16.msra.mxu0 0
    %150 = vmatprep.subr.bf16.mxu0 0
    %151 = vmatpush2.bf16.msra.mxu0 0
    %152 = vmatprep.subr.bf16.mxu0 0
    %153 = vmatpush2.bf16.msra.mxu0 0
    %154 = vmatprep.subr.bf16.mxu0 0
    %155 = vmatpush2.bf16.msra.mxu0 0
    %156 = vmatprep.subr.bf16.mxu0 0
    %157 = vmatpush2.bf16.msra.mxu0 0
    %158 = vmatprep.subr.bf16.mxu0 0
    %159 = vmatpush2.bf16.msra.mxu0 0
    %160 = vmatprep.subr.bf16.mxu0 0
    %161 = vmatpush2.bf16.msra.mxu0 0
    %162 = vmatprep.subr.bf16.mxu0 0
    %163 = vmatpush2.bf16.msra.mxu0 0
    %164 = vmatprep.mubr.bf16.mxu0 0
    %165 = vmatmul.mubr.bf16.gmra.mxu0 %v130
    %v166 = vpop.f32.mrf.mxu0
    %v167 = vadd.f32 %v115, %v166
    %v168 = vpop.f32.mrf.mxu0
    %v169 = vpop.f32.mrf.mxu0
    %v170 = vpop.f32.mrf.mxu0
    %171 = vdwg.mxu0
    %vm172 = vcmask 7168
    %173 = vst.msk [vmem:[%s5] sm:$0xff] %vm172, %v167
    // Predicated region
    $region26: #{tpu_custom_call.1} parent=1 // pred_check
      _
    $region27: #{tpu_custom_call.1} parent=1 // pred_check_branch
      %175 = sbr.rel (0) target = $region29
    $region28: #{tpu_custom_call.1} parent=1 // pred_region
      _
    $region29: #{tpu_custom_call.1} parent=1 // pred_fallthru
      _
    // Predicated region
    $region30: #{tpu_custom_call.1} parent=1 // pred_check
      _
    $region31: #{tpu_custom_call.1} parent=1 // pred_check_branch
      %177 = sbr.rel (0) target = $region33
    $region32: #{tpu_custom_call.1} parent=1 // pred_region
      _
    $region33: #{tpu_custom_call.1} parent=1 // pred_fallthru
      _
    %178 = vsyncpa [#allocation4], 1

// kernel: tpu_custom_call.1
$region0: #{tpu_custom_call.1}
  #allocation0 [shape = 'u32[]', space=smem, size = 0x4, offset = 0x4, fixed_abs, tag = 'smem constant byte address 0x4 - core index']
  #allocation1 [shape = 'u32[144,128]{1,0:T(1,128)}', space=vmem, size = 0x12000, scoped, tag = 'internal scratch']
  #allocation2 [shape = 'f32[1,1]{1,0:T(1,128)S(1)}', space=vmem, size = 0x200, scoped, tag = 'scoped memory for tpu_custom_call.1']
  %s0 = inlined_call_operand.hbm [shape: f32[8,32], index: 0, kind: input, shape index: {}]
  %s1 = inlined_call_operand.vmem [shape: bf16[32,32], index: 1, kind: input, shape index: {}]
  %s2 = inlined_call_operand.vmem [shape: f32[1,32], index: 2, kind: input, shape index: {}]
  %s3 = inlined_call_operand.vmem [shape: bf16[32,1], index: 3, kind: input, shape index: {}]
  %s4 = inlined_call_operand.<no memory space> [shape: f32[1,1], index: 4, kind: input, shape index: {}]
  %s5 = inlined_call_operand.vmem [shape: f32[8,1], index: 5, kind: output, shape index: {}]
  %s6 = sld [smem:[#allocation0]]
  $region34: #{tpu_custom_call.1} parent=0
    _
  %s8 = ssub.s32 1, %s6
  %s9 = scalar_select 0, %s8, %s6
  %v10 = vstv %s4
  %11 = vst [vmem:[#allocation2] sm:$0x1] %v10
  $region1: #{tpu_custom_call.1} parent=0
    #allocation3 [shape = 'u8[4096]{0}', space=vmem, size = 0x1000, scoped, tag = 'input window, operand 0, single buffered']
    #allocation4 [shape = 's32[1]{0}', space=sflag, size = 0x4, scoped, tag = 'scoped memory for tpu_custom_call.1']
    %12 = vsyncpa [#allocation4], 0
    // Predicated region
    $region2: #{tpu_custom_call.1} parent=1 // pred_check
      _
    $region3: #{tpu_custom_call.1} parent=1 // pred_check_branch
      %14 = sbr.rel (0) target = $region5
    $region4: #{tpu_custom_call.1} parent=1 // pred_region
      %s16 = ssub.s32 128, 128
      %17 = vsyncadd [#allocation4], %s16
      %s19 = sshll.u32 [#allocation3], 4
      %s20 = int_to_ptr.vmem [resolvable:$true] %s19
      %22 = dma.hbm_to_vmem [thread:$0]  %s0, 128, %s20, [#allocation4]
    $region5: #{tpu_custom_call.1} parent=1 // pred_fallthru
      _
    // Predicated region
    $region6: #{tpu_custom_call.1} parent=1 // pred_check
      _
    $region7: #{tpu_custom_call.1} parent=1 // pred_check_branch
      %24 = sbr.rel (0) target = $region9
    $region8: #{tpu_custom_call.1} parent=1 // pred_region
      _
    $region9: #{tpu_custom_call.1} parent=1 // pred_fallthru
      _
    // Predicated region
    $region10: #{tpu_custom_call.1} parent=1 // pred_check
      _
    $region11: #{tpu_custom_call.1} parent=1 // pred_check_branch
      %26 = sbr.rel (0) target = $region13
    $region12: #{tpu_custom_call.1} parent=1 // pred_region
      _
    $region13: #{tpu_custom_call.1} parent=1 // pred_fallthru
      _
    // Predicated region
    $region14: #{tpu_custom_call.1} parent=1 // pred_check
      _
    $region15: #{tpu_custom_call.1} parent=1 // pred_check_branch
      %28 = sbr.rel (0) target = $region17
    $region16: #{tpu_custom_call.1} parent=1 // pred_region
      _
    $region17: #{tpu_custom_call.1} parent=1 // pred_fallthru
      _
    // Predicated region
    $region18: #{tpu_custom_call.1} parent=1 // pred_check
      _
    $region19: #{tpu_custom_call.1} parent=1 // pred_check_branch
      %30 = sbr.rel (0) target = $region21
    $region20: #{tpu_custom_call.1} parent=1 // pred_region
      _
    $region21: #{tpu_custom_call.1} parent=1 // pred_fallthru
      _
    // Predicated region
    $region22: #{tpu_custom_call.1} parent=1 // pred_check
      _
    $region23: #{tpu_custom_call.1} parent=1 // pred_check_branch
      %32 = sbr.rel (0) target = $region25
    $region24: #{tpu_custom_call.1} parent=1 // pred_region
      %33 = dma.done [#allocation4], 128
    $region25: #{tpu_custom_call.1} parent=1 // pred_fallthru
      _
    %v35 = vld [vmem:[#allocation3] sm:$0xff]
    %v36 = vpack.c.bf16 %v35, %v35
    %v37 = vld [vmem:[%s1] sm:$0xf]
    %v38 = vld [vmem:[%s1 + $0x4] sm:$0xf]
    %v39 = vld [vmem:[%s1 + $0x8] sm:$0xf]
    %v40 = vld [vmem:[%s1 + $0xc] sm:$0xf]
    %v41 = vld [vmem:[%s2] sm:$0x1]
    %v43 = vlaneseq
    %v44 = vshrl.u32 %v43, 7
    %v45 = vsub.s32 0, %v44
    %v46 = vrot.slane %v41, %v45
    %v52 = vunpack.c.l.b16 %v37
    %v53 = vunpack.c.l.b16 %v38
    %v54 = vunpack.c.l.b16 %v39
    %v55 = vunpack.c.l.b16 %v40
    %v56 = vpack.c.b16 %v53, %v52
    %v57 = vpack.c.b16 %v55, %v54
    %vm60 = vcmask 261120
    %v62 = vsel %vm60, %v36, 0
    %64 = vmatprep.subr.bf16.mxu0 0
    %65 = vmatpush1.bf16.msra.mxu0 0
    %66 = vmatprep.subr.bf16.mxu0 0
    %67 = vmatpush1.bf16.msra.mxu0 0
    %68 = vmatprep.subr.bf16.mxu0 0
    %69 = vmatpush1.bf16.msra.mxu0 0
    %70 = vmatprep.subr.bf16.mxu0 0
    %71 = vmatpush1.bf16.msra.mxu0 0
    %72 = vmatprep.subr.bf16.mxu0 0
    %73 = vmatpush1.bf16.msra.mxu0 0
    %74 = vmatprep.subr.bf16.mxu0 0
    %75 = vmatpush1.bf16.msra.mxu0 0
    %76 = vmatprep.subr.bf16.mxu0 0
    %77 = vmatpush1.bf16.msra.mxu0 %v57
    %78 = vmatprep.subr.bf16.mxu0 0
    %79 = vmatpush1.bf16.msra.mxu0 %v56
    %80 = vmatprep.subr.bf16.mxu0 0
    %81 = vmatpush2.bf16.msra.mxu0 0
    %82 = vmatprep.subr.bf16.mxu0 0
    %83 = vmatpush2.bf16.msra.mxu0 0
    %84 = vmatprep.subr.bf16.mxu0 0
    %85 = vmatpush2.bf16.msra.mxu0 0
    %86 = vmatprep.subr.bf16.mxu0 0
    %87 = vmatpush2.bf16.msra.mxu0 0
    %88 = vmatprep.subr.bf16.mxu0 0
    %89 = vmatpush2.bf16.msra.mxu0 0
    %90 = vmatprep.subr.bf16.mxu0 0
    %91 = vmatpush2.bf16.msra.mxu0 0
    %92 = vmatprep.subr.bf16.mxu0 0
    %93 = vmatpush2.bf16.msra.mxu0 0
    %94 = vmatprep.subr.bf16.mxu0 0
    %95 = vmatpush2.bf16.msra.mxu0 0
    %96 = vmatprep.mubr.bf16.mxu0 0
    %97 = vmatmul.mubr.bf16.gmra.mxu0 %v62
    %v98 = vpop.f32.mrf.mxu0
    %v99 = vadd.f32 %v46, %v98
    %v100 = vpop.f32.mrf.mxu0
    %v101 = vpop.f32.mrf.mxu0
    %v102 = vpop.f32.mrf.mxu0
    %103 = vdwg.mxu0
    %v104 = vtanh.pop %v99
    %v105 = vpack.c.bf16 %v104, %v104
    %v106 = vld [vmem:[%s3] sm:$0xf]
    %v107 = vld [vmem:[%s3 + $0x4] sm:$0xf]
    %v108 = vld [vmem:[%s3 + $0x8] sm:$0xf]
    %v109 = vld [vmem:[%s3 + $0xc] sm:$0xf]
    %v110 = vld [vmem:[#allocation2] sm:$0x1]
    %v112 = vlaneseq
    %v113 = vshrl.u32 %v112, 7
    %v114 = vsub.s32 0, %v113
    %v115 = vrot.slane %v110, %v114
    %v121 = vunpack.c.l.b16 %v106
    %v122 = vunpack.c.l.b16 %v107
    %v123 = vunpack.c.l.b16 %v108
    %v124 = vunpack.c.l.b16 %v109
    %v125 = vpack.c.b16 %v122, %v121
    %v126 = vpack.c.b16 %v124, %v123
    %v130 = vsel %vm60, %v105, 0
    %132 = vmatprep.subr.bf16.mxu0 0
    %133 = vmatpush1.bf16.msra.mxu0 0
    %134 = vmatprep.subr.bf16.mxu0 0
    %135 = vmatpush1.bf16.msra.mxu0 0
    %136 = vmatprep.subr.bf16.mxu0 0
    %137 = vmatpush1.bf16.msra.mxu0 0
    %138 = vmatprep.subr.bf16.mxu0 0
    %139 = vmatpush1.bf16.msra.mxu0 0
    %140 = vmatprep.subr.bf16.mxu0 0
    %141 = vmatpush1.bf16.msra.mxu0 0
    %142 = vmatprep.subr.bf16.mxu0 0
    %143 = vmatpush1.bf16.msra.mxu0 0
    %144 = vmatprep.subr.bf16.mxu0 0
    %145 = vmatpush1.bf16.msra.mxu0 %v126
    %146 = vmatprep.subr.bf16.mxu0 0
    %147 = vmatpush1.bf16.msra.mxu0 %v125
    %148 = vmatprep.subr.bf16.mxu0 0
    %149 = vmatpush2.bf16.msra.mxu0 0
    %150 = vmatprep.subr.bf16.mxu0 0
    %151 = vmatpush2.bf16.msra.mxu0 0
    %152 = vmatprep.subr.bf16.mxu0 0
    %153 = vmatpush2.bf16.msra.mxu0 0
    %154 = vmatprep.subr.bf16.mxu0 0
    %155 = vmatpush2.bf16.msra.mxu0 0
    %156 = vmatprep.subr.bf16.mxu0 0
    %157 = vmatpush2.bf16.msra.mxu0 0
    %158 = vmatprep.subr.bf16.mxu0 0
    %159 = vmatpush2.bf16.msra.mxu0 0
    %160 = vmatprep.subr.bf16.mxu0 0
    %161 = vmatpush2.bf16.msra.mxu0 0
    %162 = vmatprep.subr.bf16.mxu0 0
    %163 = vmatpush2.bf16.msra.mxu0 0
    %164 = vmatprep.mubr.bf16.mxu0 0
    %165 = vmatmul.mubr.bf16.gmra.mxu0 %v130
    %v166 = vpop.f32.mrf.mxu0
    %v167 = vadd.f32 %v115, %v166
    %v168 = vpop.f32.mrf.mxu0
    %v169 = vpop.f32.mrf.mxu0
    %v170 = vpop.f32.mrf.mxu0
    %171 = vdwg.mxu0
    %vm172 = vcmask 7168
    %173 = vst.msk [vmem:[%s5] sm:$0xff] %vm172, %v167
    // Predicated region
    $region26: #{tpu_custom_call.1} parent=1 // pred_check
      _
    $region27: #{tpu_custom_call.1} parent=1 // pred_check_branch
      %175 = sbr.rel (0) target = $region29
    $region28: #{tpu_custom_call.1} parent=1 // pred_region
      _
    $region29: #{tpu_custom_call.1} parent=1 // pred_fallthru
      _
    // Predicated region
    $region30: #{tpu_custom_call.1} parent=1 // pred_check
      _
    $region31: #{tpu_custom_call.1} parent=1 // pred_check_branch
      %177 = sbr.rel (0) target = $region33
    $region32: #{tpu_custom_call.1} parent=1 // pred_region
      _
    $region33: #{tpu_custom_call.1} parent=1 // pred_fallthru
      _
    %178 = vsyncpa [#allocation4], 1

</llo_original>
